<compile_context>
chip_gen: v6e
topology: v6e:2x2x1
jax: 0.10.0
libtpu: 0.0.40
codegen_flags: <defaults>
</compile_context>

<pallas_src>
import jax
import jax.numpy as jnp
from jax import lax
from jax.experimental import pallas as pl
from jax.experimental.pallas import tpu as pltpu


def _make_cls_head_kernel(M, tile_m, num_tiles):
    inv_m = 1.0 / float(M)
    needs_mask = (M % tile_m) != 0  # static (trace-time) decision

    def kernel(x_ref, w1_ref, b1_ref, w2_ref, b2_ref, o_ref, acc_ref):
        i = pl.program_id(0)

        @pl.when(i == 0)
        def _init():
            acc_ref[...] = jnp.zeros_like(acc_ref)

        x = x_ref[...]  # (R, tile_m, D)
        if needs_mask:
            # Zero out rows past the true M (out-of-bounds block padding is
            # undefined data).  0-fill via select so NaN garbage can't leak.
            row = lax.broadcasted_iota(jnp.int32, (1, tile_m, 1), 1)
            valid = (row + i * tile_m) < M
            x = jnp.where(valid, x, 0.0)

        # Running row-sum over tokens (mean applied once at the end).
        acc_ref[...] += jnp.sum(x, axis=1)  # (R, D)

        @pl.when(i == num_tiles - 1)
        def _finalize():
            feat = acc_ref[...] * inv_m                              # (R, D)
            # Linear(D -> H) + ReLU on the MXU (R rows fill MXU rows when
            # the caller batches multiple head evaluations).
            h = jnp.dot(feat, w1_ref[...],
                        preferred_element_type=jnp.float32)
            h = jnp.maximum(h + b1_ref[...], 0.0)                    # (R, H)
            # Linear(H -> 1) as a VPU dot: w2 stored as a (1, H) row.
            logit = jnp.sum(h * w2_ref[...], axis=-1, keepdims=True)  # (R, 1)
            o_ref[...] = logit + b2_ref[0]                           # b2 in SMEM

    return kernel


def _pick_tile_m(R, M, D, itemsize=4, block_budget_bytes=4 << 20):
    """Largest multiple-of-8 row tile whose x block stays under ~4 MiB."""
    t = block_budget_bytes // max(1, R * D * itemsize)
    t = int(max(8, min(1024, (t // 8) * 8)))
    m_pad = ((M + 7) // 8) * 8
    return max(8, min(t, m_pad))


def mlp_cls_head_batched(x, w1, b1, w2_row, b2, *, tile_m=None):
    """Batched MLPClsHead: x (R, B, N, D) -> (R,) logits.

    Each r computes the module forward:  relu(mean(x[r],(0,1)) @ w1 + b1) . w2 + b2
    w1: (D, H)   (= torch W1.T)     b1: (1, H)
    w2_row: (1, H) (= torch W2 row) b2: (1,) scalar (SMEM)
    """
    R, B, N, D = x.shape
    H = w1.shape[1]
    M = B * N
    x3d = x.reshape(R, M, D).astype(jnp.float32)

    if tile_m is None:
        tile_m = _pick_tile_m(R, M, D)
    num_tiles = pl.cdiv(M, tile_m)

    kernel = _make_cls_head_kernel(M, tile_m, num_tiles)

    # VMEM accounting (double-buffered x tiles dominate); keep well under the
    # v7x 64 MiB physical / 32 MiB default-scoped limits.
    x_block_bytes = R * tile_m * D * 4
    w_bytes = (D * H + 2 * H) * 4
    acc_bytes = max(R, 8) * D * 4
    out_bytes = max(R, 8) * 128 * 4
    vmem_needed = 2 * x_block_bytes + 2 * w_bytes + acc_bytes + 2 * out_bytes
    vmem_limit = int(min(32 << 20, max(vmem_needed + (2 << 20), 8 << 20)))

    cost = pl.CostEstimate(
        flops=int(R * M * D + 2 * R * D * H + 3 * R * H),
        transcendentals=0,
        bytes_accessed=int((x3d.size + w1.size + b1.size + w2_row.size) * 4
                           + b2.size * 4 + R * 4),
    )

    out = pl.pallas_call(
        kernel,
        out_shape=jax.ShapeDtypeStruct((R, 1), jnp.float32),
        grid=(num_tiles,),
        in_specs=[
            pl.BlockSpec((R, tile_m, D), lambda i: (0, i, 0)),   # x: pipelined tiles
            pl.BlockSpec((D, H), lambda i: (0, 0)),              # w1: resident
            pl.BlockSpec((1, H), lambda i: (0, 0)),              # b1: resident
            pl.BlockSpec((1, H), lambda i: (0, 0)),              # w2 row: resident
            pl.BlockSpec(memory_space=pltpu.MemorySpace.SMEM),   # b2 scalar
        ],
        out_specs=pl.BlockSpec((R, 1), lambda i: (0, 0)),
        scratch_shapes=[pltpu.VMEM((R, D), jnp.float32)],        # running row-sum
        compiler_params=pltpu.CompilerParams(
            dimension_semantics=("arbitrary",),                  # reduction axis
            vmem_limit_bytes=vmem_limit,
        ),
        cost_estimate=cost,
    )(x3d, w1, b1, w2_row, b2)

    return out[:, 0]


def mlp_cls_head(x, w1, b1, w2_row, b2):
    """Single MLPClsHead.forward: x (B, N, D) -> 0-d scalar logit."""
    return mlp_cls_head_batched(x[None], w1, b1, w2_row, b2)[0]


if __name__ == "__main__":
    D, H = 256, 128  # MLPClsHead defaults (in_dim=256, hidden_dim=128)
    key = jax.random.PRNGKey(0)
    kx, kxb, kw1, kb1, kw2, kb2 = jax.random.split(key, 6)

    # Params. torch Linear weights are (out, in); we store W1 transposed
    # (D, H) and W2 directly as a (1, H) row for the VPU dot.
    w1 = jax.random.normal(kw1, (D, H), jnp.float32) * (1.0 / jnp.sqrt(D))
    b1 = jax.random.normal(kb1, (1, H), jnp.float32) * 0.01
    w2 = jax.random.normal(kw2, (1, H), jnp.float32) * (1.0 / jnp.sqrt(H))
    b2 = jax.random.normal(kb2, (1,), jnp.float32) * 0.01

    def reference_single(x):
        feat = jnp.mean(x, axis=(0, 1))[None, :]
        h = jnp.maximum(feat @ w1 + b1, 0.0)
        return (jnp.sum(h * w2, axis=-1) + b2[0])[0]

    # 1) Single-head call (matches the module's per-call semantics),
    #    small sam_tokens_out-like shape.
    B, N = 2, 8
    x = jax.random.normal(kx, (B, N, D), jnp.float32)
    out = jax.block_until_ready(mlp_cls_head(x, w1, b1, w2, b2))
    ref = reference_single(x)
    assert out.shape == (), f"expected scalar, got {out.shape}"
    assert jnp.allclose(out, ref, atol=1e-4, rtol=1e-4), (out, ref)

    # 2) Batched heads (amortizes W1 DMA / fills MXU rows) + multi-tile
    #    row-sum with a masked partial last tile (M=74, tile_m=32 -> 3 tiles).
    R, Bb, Nb = 4, 2, 37
    xb = jax.random.normal(kxb, (R, Bb, Nb, D), jnp.float32)
    outb = jax.block_until_ready(
        mlp_cls_head_batched(xb, w1, b1, w2, b2, tile_m=32))
    refb = jax.vmap(reference_single)(xb)
    assert outb.shape == (R,), outb.shape
    assert jnp.allclose(outb, refb, atol=1e-4, rtol=1e-4), (outb, refb)

    print("KERNEL_OK")
</pallas_src>

<mosaic_0001>
module attributes {stable_mosaic.version = 11 : i64} {
  func.func @kernel(%arg0: i32, %arg1: memref<1x16x256xf32, #tpu.memory_space<vmem>>, %arg2: memref<256x128xf32, #tpu.memory_space<vmem>>, %arg3: memref<1x128xf32, #tpu.memory_space<vmem>>, %arg4: memref<1x128xf32, #tpu.memory_space<vmem>>, %arg5: memref<1xf32, #tpu.memory_space<smem>>, %arg6: memref<1x1xf32, #tpu.memory_space<vmem>>, %arg7: memref<1x256xf32, #tpu.memory_space<vmem>>) attributes {dimension_semantics = [#tpu.dimension_semantics<arbitrary>], iteration_bounds = array<i64: 1>, scalar_prefetch = 0 : i64, scratch_operands = 1 : i64, tpu.core_type = #tpu.core_type<tc>, window_params = [{transform_indices = @transform_0, window_bounds = array<i64: 1, 16, 256>}, {pipeline_mode = #tpu.pipeline_mode<synchronous>, transform_indices = @transform_1, window_bounds = array<i64: 256, 128>}, {pipeline_mode = #tpu.pipeline_mode<synchronous>, transform_indices = @transform_2, window_bounds = array<i64: 1, 128>}, {pipeline_mode = #tpu.pipeline_mode<synchronous>, transform_indices = @transform_3, window_bounds = array<i64: 1, 128>}, {transform_indices = @transform_4, window_bounds = array<i64: 1>}, {pipeline_mode = #tpu.pipeline_mode<synchronous>, transform_indices = @transform_5, window_bounds = array<i64: 1, 1>}]} {
    %c0_i32 = arith.constant 0 : i32
    %0 = arith.cmpi eq, %arg0, %c0_i32 : i32
    %1 = arith.extui %0 : i1 to i32
    %c0_i32_0 = arith.constant 0 : i32
    %2 = arith.cmpi ne, %1, %c0_i32_0 : i32
    scf.if %2 {
      %cst_9 = arith.constant 0.000000e+00 : f32
      %11 = vector.broadcast %cst_9 : f32 to vector<1x256xf32>
      %c0_10 = arith.constant 0 : index
      %c0_11 = arith.constant 0 : index
      %12 = vector.load %arg7[%c0_10, %c0_11] : memref<1x256xf32, #tpu.memory_space<vmem>>, vector<1x256xf32>
      tpu.vector_store %arg7[%c0_10, %c0_11], %11 {strides = array<i32>} : memref<1x256xf32, #tpu.memory_space<vmem>>, vector<1x256xf32>,
    } else {
    }
    %c0 = arith.constant 0 : index
    %c0_1 = arith.constant 0 : index
    %c0_2 = arith.constant 0 : index
    %3 = vector.load %arg1[%c0, %c0_1, %c0_2] : memref<1x16x256xf32, #tpu.memory_space<vmem>>, vector<1x16x256xf32>
    %c0_3 = arith.constant 0 : index
    %c0_4 = arith.constant 0 : index
    %4 = vector.load %arg7[%c0_3, %c0_4] : memref<1x256xf32, #tpu.memory_space<vmem>>, vector<1x256xf32>
    %cst = arith.constant dense<0.000000e+00> : vector<1x256xf32>
    %5 = vector.multi_reduction <add>, %3, %cst [1] : vector<1x16x256xf32> to vector<1x256xf32>
    %6 = arith.addf %4, %5 : vector<1x256xf32>
    %c0_5 = arith.constant 0 : index
    %c0_6 = arith.constant 0 : index
    %7 = vector.load %arg7[%c0_5, %c0_6] : memref<1x256xf32, #tpu.memory_space<vmem>>, vector<1x256xf32>
    tpu.vector_store %arg7[%c0_5, %c0_6], %6 {strides = array<i32>} : memref<1x256xf32, #tpu.memory_space<vmem>>, vector<1x256xf32>,
    %c0_i32_7 = arith.constant 0 : i32
    %8 = arith.cmpi eq, %arg0, %c0_i32_7 : i32
    %9 = arith.extui %8 : i1 to i32
    %c0_i32_8 = arith.constant 0 : i32
    %10 = arith.cmpi ne, %9, %c0_i32_8 : i32
    scf.if %10 {
      %c0_9 = arith.constant 0 : index
      %c0_10 = arith.constant 0 : index
      %11 = vector.load %arg7[%c0_9, %c0_10] : memref<1x256xf32, #tpu.memory_space<vmem>>, vector<1x256xf32>
      %cst_11 = arith.constant 6.250000e-02 : f32
      %12 = vector.broadcast %cst_11 : f32 to vector<1x256xf32>
      %13 = arith.mulf %11, %12 : vector<1x256xf32>
      %c0_12 = arith.constant 0 : index
      %c0_13 = arith.constant 0 : index
      %14 = vector.load %arg2[%c0_12, %c0_13] : memref<256x128xf32, #tpu.memory_space<vmem>>, vector<256x128xf32>
      %cst_14 = arith.constant dense<0.000000e+00> : vector<1x128xf32>
      %15 = tpu.matmul %13, %14, %cst_14 {dimension_numbers = #tpu.dot_dimension_numbers<[1], [0], [0], [1], [0, 0, 1, 1], [], []>} : vector<1x256xf32>, vector<256x128xf32>, vector<1x128xf32> -> vector<1x128xf32>
      %c0_15 = arith.constant 0 : index
      %c0_16 = arith.constant 0 : index
      %16 = vector.load %arg3[%c0_15, %c0_16] : memref<1x128xf32, #tpu.memory_space<vmem>>, vector<1x128xf32>
      %17 = arith.addf %15, %16 : vector<1x128xf32>
      %cst_17 = arith.constant 0.000000e+00 : f32
      %18 = vector.broadcast %cst_17 : f32 to vector<1x128xf32>
      %19 = arith.maximumf %17, %18 : vector<1x128xf32>
      %c0_18 = arith.constant 0 : index
      %c0_19 = arith.constant 0 : index
      %20 = vector.load %arg4[%c0_18, %c0_19] : memref<1x128xf32, #tpu.memory_space<vmem>>, vector<1x128xf32>
      %21 = arith.mulf %19, %20 : vector<1x128xf32>
      %cst_20 = arith.constant dense<0.000000e+00> : vector<1xf32>
      %22 = vector.multi_reduction <add>, %21, %cst_20 [1] : vector<1x128xf32> to vector<1xf32>
      %23 = vector.shape_cast %22 : vector<1xf32> to vector<1x1xf32>
      %c0_21 = arith.constant 0 : index
      %24 = memref.load %arg5[%c0_21] : memref<1xf32, #tpu.memory_space<smem>>
      %25 = vector.broadcast %24 : f32 to vector<1x1xf32>
      %26 = arith.addf %23, %25 : vector<1x1xf32>
      %c0_22 = arith.constant 0 : index
      %c0_23 = arith.constant 0 : index
      %27 = vector.load %arg6[%c0_22, %c0_23] : memref<1x1xf32, #tpu.memory_space<vmem>>, vector<1x1xf32>
      tpu.vector_store %arg6[%c0_22, %c0_23], %26 {strides = array<i32>} : memref<1x1xf32, #tpu.memory_space<vmem>>, vector<1x1xf32>,
    } else {
    }
    return
  }
  func.func @transform_0(%arg0: i32) -> (i32, i32, i32) {
    %c0_i32 = arith.constant 0 : i32
    %c0_i32_0 = arith.constant 0 : i32
    %c0_i32_1 = arith.constant 0 : i32
    return %c0_i32, %arg0, %c0_i32_0 : i32, i32, i32
  }
  func.func @transform_1(%arg0: i32) -> (i32, i32) {
    %c0_i32 = arith.constant 0 : i32
    %c0_i32_0 = arith.constant 0 : i32
    %c0_i32_1 = arith.constant 0 : i32
    return %c0_i32, %c0_i32_0 : i32, i32
  }
  func.func @transform_2(%arg0: i32) -> (i32, i32) {
    %c0_i32 = arith.constant 0 : i32
    %c0_i32_0 = arith.constant 0 : i32
    %c0_i32_1 = arith.constant 0 : i32
    return %c0_i32, %c0_i32_0 : i32, i32
  }
  func.func @transform_3(%arg0: i32) -> (i32, i32) {
    %c0_i32 = arith.constant 0 : i32
    %c0_i32_0 = arith.constant 0 : i32
    %c0_i32_1 = arith.constant 0 : i32
    return %c0_i32, %c0_i32_0 : i32, i32
  }
  func.func @transform_4(%arg0: i32) -> i32 {
    %c0_i32 = arith.constant 0 : i32
    %c0_i32_0 = arith.constant 0 : i32
    return %c0_i32 : i32
  }
  func.func @transform_5(%arg0: i32) -> (i32, i32) {
    %c0_i32 = arith.constant 0 : i32
    %c0_i32_0 = arith.constant 0 : i32
    %c0_i32_1 = arith.constant 0 : i32
    return %c0_i32, %c0_i32_0 : i32, i32
  }
}

</mosaic_0001>

<llo_original>
// kernel: tpu_custom_call.1
$region0: #{tpu_custom_call.1}
  #allocation0 [shape = 'u32[]', space=smem, size = 0x4, offset = 0x4, fixed_abs, tag = 'smem constant byte address 0x4 - core index']
  #allocation1 [shape = 'u32[144,128]{1,0:T(1,128)}', space=vmem, size = 0x12000, scoped, tag = 'internal scratch']
  #allocation2 [shape = 'f32[1,256]{1,0:T(1,128)}', space=vmem, size = 0x400, scoped, tag = 'scratch operand']
  #allocation3 [shape = 'f32[1]{0:T(128)S(6)}', space=smem, size = 0x200, scoped, tag = 'scoped memory for tpu_custom_call.1']
  %s0 = inlined_call_operand.hbm [shape: f32[1,16,256], index: 0, kind: input, shape index: {}]
  %s1 = inlined_call_operand.hbm [shape: f32[256,128], index: 1, kind: input, shape index: {}]
  %s2 = inlined_call_operand.vmem [shape: f32[1,128], index: 2, kind: input, shape index: {}]
  %s3 = inlined_call_operand.vmem [shape: f32[1,128], index: 3, kind: input, shape index: {}]
  %s4 = inlined_call_operand.<no memory space> [shape: f32[1], index: 4, kind: input, shape index: {}]
  %s5 = inlined_call_operand.hbm [shape: f32[1,1], index: 5, kind: output, shape index: {}]
  %s6 = sld [smem:[#allocation0]]
  $region46: #{tpu_custom_call.1} parent=0
    _
  %s8 = ssub.s32 1, %s6
  %s9 = scalar_select 0, %s8, %s6
  %10 = sst [smem:[#allocation3]] %s4
  $region1: #{tpu_custom_call.1} parent=0
    #allocation4 [shape = 'u8[16384]{0}', space=vmem, size = 0x4000, scoped, tag = 'input window, operand 0, single buffered']
    #allocation5 [shape = 's32[1]{0}', space=sflag, size = 0x4, scoped, tag = 'scoped memory for tpu_custom_call.1']
    #allocation6 [shape = 's32[1]{0}', space=sflag, size = 0x4, scoped, tag = 'scoped memory for tpu_custom_call.1']
    #allocation7 [shape = 'u8[131072]{0}', space=vmem, size = 0x20000, scoped, tag = 'input window, operand 1, single buffered']
    #allocation8 [shape = 's32[1]{0}', space=sflag, size = 0x4, scoped, tag = 'scoped memory for tpu_custom_call.1']
    #allocation9 [shape = 'u8[512]{0}', space=vmem, size = 0x400, scoped, tag = 'output window, operand 0, single buffered']
    %11 = vsyncpa [#allocation5], 0
    %12 = vsyncpa [#allocation8], 0
    %13 = vsyncpa [#allocation6], 0
    // Predicated region
    $region2: #{tpu_custom_call.1} parent=1 // pred_check
      _
    $region3: #{tpu_custom_call.1} parent=1 // pred_check_branch
      %15 = sbr.rel (0) target = $region5
    $region4: #{tpu_custom_call.1} parent=1 // pred_region
      %s17 = ssub.s32 512, 512
      %18 = vsyncadd [#allocation5], %s17
      %s19 = sshll.u32 [#allocation4], 4
      %s20 = int_to_ptr.vmem [resolvable:$true] %s19
      %25 = dma.hbm_to_vmem [thread:$0]  %s0, 512, %s20, [#allocation5], 256, 256, 16
    $region5: #{tpu_custom_call.1} parent=1 // pred_fallthru
      _
    // Predicated region
    $region6: #{tpu_custom_call.1} parent=1 // pred_check
      _
    $region7: #{tpu_custom_call.1} parent=1 // pred_check_branch
      %27 = sbr.rel (0) target = $region9
    $region8: #{tpu_custom_call.1} parent=1 // pred_region
      %s29 = ssub.s32 4096, 4096
      %30 = vsyncadd [#allocation8], %s29
      %s31 = sshll.u32 [#allocation7], 4
      %s32 = int_to_ptr.vmem [resolvable:$true] %s31
      %37 = dma.hbm_to_vmem [thread:$0]  %s1, 4096, %s32, [#allocation8], 128, 128, 8
    $region9: #{tpu_custom_call.1} parent=1 // pred_fallthru
      _
    // Predicated region
    $region10: #{tpu_custom_call.1} parent=1 // pred_check
      _
    $region11: #{tpu_custom_call.1} parent=1 // pred_check_branch
      %39 = sbr.rel (0) target = $region13
    $region12: #{tpu_custom_call.1} parent=1 // pred_region
      _
    $region13: #{tpu_custom_call.1} parent=1 // pred_fallthru
      _
    // Predicated region
    $region14: #{tpu_custom_call.1} parent=1 // pred_check
      _
    $region15: #{tpu_custom_call.1} parent=1 // pred_check_branch
      %41 = sbr.rel (0) target = $region17
    $region16: #{tpu_custom_call.1} parent=1 // pred_region
      _
    $region17: #{tpu_custom_call.1} parent=1 // pred_fallthru
      _
    // Predicated region
    $region18: #{tpu_custom_call.1} parent=1 // pred_check
      _
    $region19: #{tpu_custom_call.1} parent=1 // pred_check_branch
      %43 = sbr.rel (0) target = $region21
    $region20: #{tpu_custom_call.1} parent=1 // pred_region
      _
    $region21: #{tpu_custom_call.1} parent=1 // pred_fallthru
      _
    // Predicated region
    $region22: #{tpu_custom_call.1} parent=1 // pred_check
      _
    $region23: #{tpu_custom_call.1} parent=1 // pred_check_branch
      %45 = sbr.rel (0) target = $region25
    $region24: #{tpu_custom_call.1} parent=1 // pred_region
      %46 = dma.done [#allocation5], 512
    $region25: #{tpu_custom_call.1} parent=1 // pred_fallthru
      _
    // Predicated region
    $region26: #{tpu_custom_call.1} parent=1 // pred_check
      _
    $region27: #{tpu_custom_call.1} parent=1 // pred_check_branch
      %48 = sbr.rel (0) target = $region29
    $region28: #{tpu_custom_call.1} parent=1 // pred_region
      %49 = dma.done [#allocation8], 4096
    $region29: #{tpu_custom_call.1} parent=1 // pred_fallthru
      _
    %p50 = scmp.eq.s32.totalorder 0, 0
    // Predicated region
    $region30: #{tpu_custom_call.1} parent=1 // pred_check
      %p51 = pneg %p50
    $region31: #{tpu_custom_call.1} parent=1 // pred_check_branch
      %53 = sbr.rel (%p51) target = $region33
    $region32: #{tpu_custom_call.1} parent=1 // pred_region
      %v54 = vlaneseq
      %vm55 = vcmp.ge.s32.totalorder %v54, 0
      %vm56 = vcmp.lt.s32.totalorder %v54, 256
      %vm57 = vmand %vm55, %vm56
      %58 = vst.msk [vmem:[#allocation2] sm:$0x3] %vm57, 0.0
    $region33: #{tpu_custom_call.1} parent=1 // pred_fallthru
      _
    %v59 = vld [vmem:[#allocation4] sm:$0xff]
    %v60 = vld [vmem:[#allocation4 + $0x8] sm:$0xff]
    %v61 = vld [vmem:[#allocation4 + $0x10] sm:$0xff]
    %v62 = vld [vmem:[#allocation4 + $0x18] sm:$0xff]
    %v63 = vld [vmem:[#allocation2] sm:$0x3]
    %v64 = vadd.f32 %v59, %v61
    %v65 = vrot.slane %v64, 4
    %v66 = vadd.f32 %v64, %v65
    %v67 = vrot.slane %v66, 2
    %v68 = vadd.f32 %v66, %v67
    %v69 = vrot.slane %v68, 1
    %v70 = vadd.f32 %v68, %v69
    %v71 = vadd.f32 %v60, %v62
    %v72 = vrot.slane %v71, 4
    %v73 = vadd.f32 %v71, %v72
    %v74 = vrot.slane %v73, 2
    %v75 = vadd.f32 %v73, %v74
    %v76 = vrot.slane %v75, 1
    %v77 = vadd.f32 %v75, %v76
    %v80 = vcombine.low %v70, %v77
    %v82 = vunpack.c.l.s4 1966171168
    %v83 = vunpack.c.0.s8 %v82
    %v84 = vlaneseq
    %v85 = vshrl.u32 %v84, 7
    %v86 = vsub.s32 %v83, %v85
    %v87 = vrot.slane %v80, %v86
    %v89 = vunpack.c.l.s4 1966171168
    %v90 = vunpack.c.0.s8 %v89
    %v91 = vlaneseq
    %v92 = vshrl.u32 %v91, 7
    %v93 = vsub.s32 %v90, %v92
    %v94 = vrot.slane %v87, %v93
    %v96 = vadd.f32 %v63, %v94
    %v97 = vlaneseq
    %vm98 = vcmp.ge.s32.totalorder %v97, 0
    %vm99 = vcmp.lt.s32.totalorder %v97, 256
    %vm100 = vmand %vm98, %vm99
    %101 = vst.msk [vmem:[#allocation2] sm:$0x3] %vm100, %v96
    // Predicated region
    $region34: #{tpu_custom_call.1} parent=1 // pred_check
      %p102 = pneg %p50
    $region35: #{tpu_custom_call.1} parent=1 // pred_check_branch
      %104 = sbr.rel (%p102) target = $region37
    $region36: #{tpu_custom_call.1} parent=1 // pred_region
      %v105 = vld [vmem:[#allocation2] sm:$0x3]
      %v106 = vmul.f32 %v105, 0.0625
      %v107 = vld [vmem:[#allocation7] sm:$0xff]
      %v108 = vld [vmem:[#allocation7 + $0x8] sm:$0xff]
      %v109 = vld [vmem:[#allocation7 + $0x10] sm:$0xff]
      %v110 = vld [vmem:[#allocation7 + $0x18] sm:$0xff]
      %v111 = vld [vmem:[#allocation7 + $0x20] sm:$0xff]
      %v112 = vld [vmem:[#allocation7 + $0x28] sm:$0xff]
      %v113 = vld [vmem:[#allocation7 + $0x30] sm:$0xff]
      %v114 = vld [vmem:[#allocation7 + $0x38] sm:$0xff]
      %v115 = vld [vmem:[#allocation7 + $0x40] sm:$0xff]
      %v116 = vld [vmem:[#allocation7 + $0x48] sm:$0xff]
      %v117 = vld [vmem:[#allocation7 + $0x50] sm:$0xff]
      %v118 = vld [vmem:[#allocation7 + $0x58] sm:$0xff]
      %v119 = vld [vmem:[#allocation7 + $0x60] sm:$0xff]
      %v120 = vld [vmem:[#allocation7 + $0x68] sm:$0xff]
      %v121 = vld [vmem:[#allocation7 + $0x70] sm:$0xff]
      %v122 = vld [vmem:[#allocation7 + $0x78] sm:$0xff]
      %v123 = vld [vmem:[#allocation7 + $0x80] sm:$0xff]
      %v124 = vld [vmem:[#allocation7 + $0x88] sm:$0xff]
      %v125 = vld [vmem:[#allocation7 + $0x90] sm:$0xff]
      %v126 = vld [vmem:[#allocation7 + $0x98] sm:$0xff]
      %v127 = vld [vmem:[#allocation7 + $0xa0] sm:$0xff]
      %v128 = vld [vmem:[#allocation7 + $0xa8] sm:$0xff]
      %v129 = vld [vmem:[#allocation7 + $0xb0] sm:$0xff]
      %v130 = vld [vmem:[#allocation7 + $0xb8] sm:$0xff]
      %v131 = vld [vmem:[#allocation7 + $0xc0] sm:$0xff]
      %v132 = vld [vmem:[#allocation7 + $0xc8] sm:$0xff]
      %v133 = vld [vmem:[#allocation7 + $0xd0] sm:$0xff]
      %v134 = vld [vmem:[#allocation7 + $0xd8] sm:$0xff]
      %v135 = vld [vmem:[#allocation7 + $0xe0] sm:$0xff]
      %v136 = vld [vmem:[#allocation7 + $0xe8] sm:$0xff]
      %v137 = vld [vmem:[#allocation7 + $0xf0] sm:$0xff]
      %v138 = vld [vmem:[#allocation7 + $0xf8] sm:$0xff]
      %v139 = vld [vmem:[%s2] sm:$0x1]
      %v141 = vlaneseq
      %v142 = vshrl.u32 %v141, 7
      %v143 = vsub.s32 0, %v142
      %v144 = vrot.slane %v106, %v143
      %v145 = vlaneseq
      %v146 = vshrl.u32 %v145, 7
      %v147 = vsub.s32 1, %v146
      %v148 = vrot.slane %v106, %v147
      %151 = vmatprep.subr.mxu0 0.0
      %152 = vmatpush1.msra.mxu0 %v122
      %153 = vmatprep.subr.mxu0 0.0
      %154 = vmatpush1.msra.mxu0 %v121
      %155 = vmatprep.subr.mxu0 0.0
      %156 = vmatpush1.msra.mxu0 %v120
      %157 = vmatprep.subr.mxu0 0.0
      %158 = vmatpush1.msra.mxu0 %v119
      %159 = vmatprep.subr.mxu0 0.0
      %160 = vmatpush1.msra.mxu0 %v118
      %161 = vmatprep.subr.mxu0 0.0
      %162 = vmatpush1.msra.mxu0 %v117
      %163 = vmatprep.subr.mxu0 0.0
      %164 = vmatpush1.msra.mxu0 %v116
      %165 = vmatprep.subr.mxu0 0.0
      %166 = vmatpush1.msra.mxu0 %v115
      %167 = vmatprep.subr.mxu0 0.0
      %168 = vmatpush1.msra.mxu0 %v114
      %169 = vmatprep.subr.mxu0 0.0
      %170 = vmatpush1.msra.mxu0 %v113
      %171 = vmatprep.subr.mxu0 0.0
      %172 = vmatpush1.msra.mxu0 %v112
      %173 = vmatprep.subr.mxu0 0.0
      %174 = vmatpush1.msra.mxu0 %v111
      %175 = vmatprep.subr.mxu0 0.0
      %176 = vmatpush1.msra.mxu0 %v110
      %177 = vmatprep.subr.mxu0 0.0
      %178 = vmatpush1.msra.mxu0 %v109
      %179 = vmatprep.subr.mxu0 0.0
      %180 = vmatpush1.msra.mxu0 %v108
      %181 = vmatprep.subr.mxu0 0.0
      %182 = vmatpush1.msra.mxu0 %v107
      %183 = vmatprep.subr.mxu0 0.0
      %184 = vmatpush2.msra.mxu0 %v138
      %185 = vmatprep.subr.mxu0 0.0
      %186 = vmatpush2.msra.mxu0 %v137
      %187 = vmatprep.subr.mxu0 0.0
      %188 = vmatpush2.msra.mxu0 %v136
      %189 = vmatprep.subr.mxu0 0.0
      %190 = vmatpush2.msra.mxu0 %v135
      %191 = vmatprep.subr.mxu0 0.0
      %192 = vmatpush2.msra.mxu0 %v134
      %193 = vmatprep.subr.mxu0 0.0
      %194 = vmatpush2.msra.mxu0 %v133
      %195 = vmatprep.subr.mxu0 0.0
      %196 = vmatpush2.msra.mxu0 %v132
      %197 = vmatprep.subr.mxu0 0.0
      %198 = vmatpush2.msra.mxu0 %v131
      %199 = vmatprep.subr.mxu0 0.0
      %200 = vmatpush2.msra.mxu0 %v130
      %201 = vmatprep.subr.mxu0 0.0
      %202 = vmatpush2.msra.mxu0 %v129
      %203 = vmatprep.subr.mxu0 0.0
      %204 = vmatpush2.msra.mxu0 %v128
      %205 = vmatprep.subr.mxu0 0.0
      %206 = vmatpush2.msra.mxu0 %v127
      %207 = vmatprep.subr.mxu0 0.0
      %208 = vmatpush2.msra.mxu0 %v126
      %209 = vmatprep.subr.mxu0 0.0
      %210 = vmatpush2.msra.mxu0 %v125
      %211 = vmatprep.subr.mxu0 0.0
      %212 = vmatpush2.msra.mxu0 %v124
      %213 = vmatprep.subr.mxu0 0.0
      %214 = vmatpush2.msra.mxu0 %v123
      %215 = vmatprep.mubr.f32.mxu0 %v148
      %216 = vmatmul.mubr.f32.gmra.mxu0 %v144
      %v217 = vpop.f32.mrf.mxu0
      %v218 = vadd.f32 %v139, %v217
      %v219 = vpop.f32.mrf.mxu0
      %220 = vdwg.mxu0
      %v221 = vmax.f32 %v218, 0.0
      %v222 = vld [vmem:[%s3] sm:$0x1]
      %v223 = vmul.f32 %v221, %v222
      %vm224 = vcmask 1040384
      %v225 = vsel %vm224, %v223, 0.0
      %226 = vadd.xlane.f32.xlu0 %v225
      %v227 = vpop.xlane.xlu0 %226
      %s228 = sld [smem:[#allocation3]]
      %v229 = vstv %s228
      %v230 = vadd.f32 %v227, %v229
      %vm231 = vcmask 0
      %232 = vst.msk [vmem:[#allocation9] sm:$0x1] %vm231, %v230
    $region37: #{tpu_custom_call.1} parent=1 // pred_fallthru
      _
    // Predicated region
    $region38: #{tpu_custom_call.1} parent=1 // pred_check
      _
    $region39: #{tpu_custom_call.1} parent=1 // pred_check_branch
      %234 = sbr.rel (0) target = $region41
    $region40: #{tpu_custom_call.1} parent=1 // pred_region
      %s236 = ssub.s32 16, 16
      %237 = vsyncadd [#allocation6], %s236
      %s239 = sshll.u32 [#allocation9], 4
      %s240 = int_to_ptr.vmem [resolvable:$true] %s239
      %242 = dma.vmem_to_hbm [thread:$0]  %s240, 16, %s5, [#allocation6]
    $region41: #{tpu_custom_call.1} parent=1 // pred_fallthru
      _
    // Predicated region
    $region42: #{tpu_custom_call.1} parent=1 // pred_check
      _
    $region43: #{tpu_custom_call.1} parent=1 // pred_check_branch
      %244 = sbr.rel (0) target = $region45
    $region44: #{tpu_custom_call.1} parent=1 // pred_region
      %245 = dma.done [#allocation6], 16
    $region45: #{tpu_custom_call.1} parent=1 // pred_fallthru
      _
    %246 = vsyncpa [#allocation5], 1
    %247 = vsyncpa [#allocation8], 1
    %248 = vsyncpa [#allocation6], 1

</llo_original>
